<compile_context>
chip_gen: v5e
topology: v5e:2x2
jax: 0.10.0
libtpu: 0.0.40
codegen_flags: <defaults>
</compile_context>

<pallas_src>
import math

import jax
import jax.numpy as jnp
from jax.experimental import pallas as pl
from jax.experimental.pallas import tpu as pltpu


# ----------------------------------------------------------------------------
# kernel: elementwise sin on one (row_block, cols) VMEM tile
# ----------------------------------------------------------------------------
def _sin_kernel(x_ref, o_ref):
    o_ref[...] = jnp.sin(x_ref[...])


# ----------------------------------------------------------------------------
# layout selection
# ----------------------------------------------------------------------------
def _ceil_to(v, m):
    return -(-v // m) * m


def _choose_layout(total, itemsize):
    """Pick a lane-dense (rows, cols, row_block, pad) layout for `total` elems.

    - cols is a multiple of 128 (full lanes); prefer one that divides `total`
      (and gives >= one full sublane group of rows) so NO padding copy is
      needed -- the wrapper is then a pure reshape.
    - row_block is a multiple of the dtype's sublane packing, capped so a tile
      stays <= ~2 MiB (in + out, double-buffered, <= ~8 MiB of VMEM).
    - For inputs bigger than one small tile we target >= 4 grid steps with an
      even count (pipeline overlap everywhere, balanced 2-TC split on v7x).
    """
    sub = max(8, 32 // itemsize)          # sublane packing: f32->8, bf16->16, i8->32

    cols = None
    for c in (1024, 512, 256, 128):       # pad-free AND full sublane groups
        if total % c == 0 and total // c >= sub:
            cols = c
            break
    if cols is None:                      # pad-free, but few rows (tiny input)
        for c in (1024, 512, 256, 128):
            if total % c == 0:
                cols = c
                break
    if cols is None:                      # general case: pad <= sub*128 elements
        cols = 128
        rows = _ceil_to(-(-total // cols), sub)
    else:
        rows = total // cols
    pad = rows * cols - total

    tile_cap_rows = max(sub, ((2 << 20) // (cols * itemsize)) // sub * sub)
    if rows * cols * itemsize <= (256 << 10) or rows <= sub:
        row_block = rows                  # tiny input: one block == full array
    else:
        min_steps = -(-rows // tile_cap_rows)   # steps forced by the tile cap
        steps = max(4, min_steps)               # >= 4 -> pipelining can overlap
        steps += steps % 2                      # even -> balanced on v7x's 2 TCs
        row_block = min(tile_cap_rows, _ceil_to(-(-rows // steps), sub))

    return rows, cols, row_block, pad


# ----------------------------------------------------------------------------
# wrapper
# ----------------------------------------------------------------------------
@jax.jit
def sin_pallas(x):
    """Elementwise sin(x) for an arbitrary-shaped array via one Pallas call."""
    shape, dtype = x.shape, x.dtype
    total = math.prod(shape) if shape else 1
    if total == 0:
        return x
    itemsize = jnp.dtype(dtype).itemsize

    rows, cols, row_block, pad = _choose_layout(total, itemsize)

    if pad == 0:
        x2 = x.reshape(rows, cols)        # free: no data movement
    else:
        # Only reached when numel % 128 != 0 (rare for NN activations); pads at
        # most sub*128 elements, but jnp.pad does materialize one extra copy.
        x2 = jnp.pad(x.reshape(-1), (0, pad)).reshape(rows, cols)

    grid = -(-rows // row_block)          # cdiv; partial last block is masked

    out2 = pl.pallas_call(
        _sin_kernel,
        out_shape=jax.ShapeDtypeStruct((rows, cols), dtype),
        grid=(grid,),
        in_specs=[pl.BlockSpec((row_block, cols), lambda i: (i, 0))],
        out_specs=pl.BlockSpec((row_block, cols), lambda i: (i, 0)),
        input_output_aliases={0: 0},      # elementwise block-for-block overwrite
        cost_estimate=pl.CostEstimate(
            flops=0,
            transcendentals=rows * cols,
            bytes_accessed=2 * rows * cols * itemsize),
        compiler_params=pltpu.CompilerParams(
            dimension_semantics=("parallel",)),
    )(x2)

    if pad == 0:
        return out2.reshape(shape)
    return out2.reshape(-1)[:total].reshape(shape)


class SinActivationPallas:
    """Pallas TPU equivalent of the PyTorch SinActivation module."""

    def __call__(self, x):
        return sin_pallas(x)


# ----------------------------------------------------------------------------
if __name__ == "__main__":
    key = jax.random.PRNGKey(0)
    x = jax.random.normal(key, (2, 4, 16, 16), jnp.float32)

    model = SinActivationPallas()
    y = model(x)
    jax.block_until_ready(y)

    assert y.shape == x.shape and y.dtype == x.dtype
    assert bool(jnp.all(jnp.isfinite(y)))
    ref = jnp.sin(x)
    assert bool(jnp.max(jnp.abs(y - ref)) < 1e-6)
    print("KERNEL_OK")
</pallas_src>

<mosaic_0001>
module attributes {stable_mosaic.version = 11 : i64} {
  func.func @_sin_kernel(%arg0: i32, %arg1: memref<8x256xf32, #tpu.memory_space<vmem>>, %arg2: memref<8x256xf32, #tpu.memory_space<vmem>>) attributes {dimension_semantics = [#tpu.dimension_semantics<parallel>], iteration_bounds = array<i64: 1>, scalar_prefetch = 0 : i64, scratch_operands = 0 : i64, tpu.core_type = #tpu.core_type<tc>, window_params = [{transform_indices = @transform_0, window_bounds = array<i64: 8, 256>}, {transform_indices = @transform_1, window_bounds = array<i64: 8, 256>}]} {
    %c0 = arith.constant 0 : index
    %c0_0 = arith.constant 0 : index
    %0 = vector.load %arg1[%c0, %c0_0] : memref<8x256xf32, #tpu.memory_space<vmem>>, vector<8x256xf32>
    %1 = math.sin %0 : vector<8x256xf32>
    %c0_1 = arith.constant 0 : index
    %c0_2 = arith.constant 0 : index
    %2 = vector.load %arg2[%c0_1, %c0_2] : memref<8x256xf32, #tpu.memory_space<vmem>>, vector<8x256xf32>
    tpu.vector_store %arg2[%c0_1, %c0_2], %1 {strides = array<i32>} : memref<8x256xf32, #tpu.memory_space<vmem>>, vector<8x256xf32>,
    return
  }
  func.func @transform_0(%arg0: i32) -> (i32, i32) {
    %c0_i32 = arith.constant 0 : i32
    %c0_i32_0 = arith.constant 0 : i32
    return %arg0, %c0_i32 : i32, i32
  }
  func.func @transform_1(%arg0: i32) -> (i32, i32) {
    %c0_i32 = arith.constant 0 : i32
    %c0_i32_0 = arith.constant 0 : i32
    return %arg0, %c0_i32 : i32, i32
  }
}

</mosaic_0001>

<llo_original>
// kernel: sin_pallas.1
$region0: #{sin_pallas.1}
  #allocation0 [shape = 'u32[]', space=smem, size = 0x4, offset = 0x4, fixed_abs, tag = 'smem constant byte address 0x4 - core index']
  #allocation1 [shape = 'u32[72,128]{1,0:T(1,128)}', space=vmem, size = 0x9000, scoped, tag = 'internal scratch']
  %s0 = inlined_call_operand.vmem [shape: f32[8,256], index: 0, kind: input, shape index: {}, may-alias: {0,1}]
  %s1 = inlined_call_operand.vmem [shape: f32[8,256], index: 1, kind: output, shape index: {}, may-alias: {0,1}]
  %s2 = sld [smem:[#allocation0]]
  $region14: #{sin_pallas.1} parent=0
    _
  %s4 = ssub.s32 1, %s2
  %s5 = scalar_select 0, %s4, %s2
  // Predicated region
  $region2: #{sin_pallas.1} parent=0 // pred_check
    _
  $region3: #{sin_pallas.1} parent=0 // pred_check_branch
    %7 = sbr.rel (0) target = $region5
  $region4: #{sin_pallas.1} parent=0 // pred_region
    _
  $region5: #{sin_pallas.1} parent=0 // pred_fallthru
    _
  %v8 = vld [vmem:[%s0] sm:$0xff]
  %v9 = vld [vmem:[%s0 + $0x8] sm:$0xff]
  %v10 = vand.u32 2147483647, %v8
  %vm11 = vcmp.le.f32.partialorder %v10, 0.7853982
  %vm12 = vcmp.lt.s32.totalorder %v8, 0
  %v13 = vand.u32 %v8, 2139095040
  %v14 = vshrl.u32 %v13, 23
  %v15 = vsub.s32 %v14, 127
  %v16 = vand.u32 2147483647, %v8
  %v17 = vand.u32 %v16, 8388607
  %v18 = vor.u32 %v17, 8388608
  %v19 = vsub.s32 0, %v18
  %v20 = vadd.s32 %v15, 1
  %vm21 = vcmp.gt.s32.totalorder %v20, 0
  %v22 = vsel %vm21, %v20, 0
  %v23 = vshrl.u32 %v22, 5
  %v24 = vand.u32 %v22, 31
  %v25 = vsub.s32 32, %v24
  %v26 = vshrl.u32 683565275, %v25
  %v27 = vshll.u32 683565275, %v24
  %v28 = vshrl.u32 2475754826, %v25
  %v29 = vor.u32 %v27, %v28
  %v30 = vshll.u32 2475754826, %v24
  %v31 = vshrl.u32 2131351028, %v25
  %v32 = vor.u32 %v30, %v31
  %v33 = vshll.u32 2131351028, %v24
  %v34 = vshrl.u32 2102212464, %v25
  %v35 = vor.u32 %v33, %v34
  %v36 = vshll.u32 2102212464, %v24
  %v37 = vshrl.u32 920167782, %v25
  %v38 = vor.u32 %v36, %v37
  %v39 = vshll.u32 920167782, %v24
  %v40 = vshrl.u32 1326507024, %v25
  %v41 = vor.u32 %v39, %v40
  %vm42 = vcmp.lt.s32.totalorder %v23, 1
  %vm43 = vcmp.lt.s32.totalorder %v23, 2
  %vm44 = vcmp.lt.s32.totalorder %v23, 3
  %vm45 = vcmp.lt.s32.totalorder %v23, 4
  %v46 = vsel %vm42, %v26, %v29
  %v47 = vsel %vm45, %v35, 2102212464
  %v48 = vsel %vm44, %v32, %v47
  %v49 = vsel %vm43, %v46, %v48
  %v50 = vsel %vm42, %v29, %v32
  %v51 = vsel %vm45, %v38, 920167782
  %v52 = vsel %vm44, %v35, %v51
  %v53 = vsel %vm43, %v50, %v52
  %v54 = vsel %vm42, %v32, %v35
  %v55 = vsel %vm45, %v41, 1326507024
  %v56 = vsel %vm44, %v38, %v55
  %v57 = vsel %vm43, %v54, %v56
  %v58 = vshll.u32 %v18, 8
  %v59 = vand.u32 %v58, 65535
  %v60 = vshrl.u32 %v58, 16
  %v61 = vand.u32 %v57, 65535
  %v62 = vshrl.u32 %v57, 16
  %v63 = vmul.u32 %v59, %v61
  %v64 = vmul.u32 %v59, %v62
  %v65 = vmul.u32 %v60, %v61
  %v66 = vmul.u32 %v60, %v62
  %v67 = vshll.u32 %v64, 16
  %v68 = vshrl.u32 %v64, 16
  %v69 = vshll.u32 %v65, 16
  %v70 = vshrl.u32 %v65, 16
  %vm71 = vc.u32 %v63, %v67
  %v72 = vsel %vm71, 1, 0
  %v73 = vadd.s32 %v63, %v67
  %v74 = vadd.s32 %v66, %v72
  %vm75 = vc.u32 %v73, %v69
  %v76 = vsel %vm75, 1, 0
  %v77 = vadd.s32 %v73, %v69
  %v78 = vadd.s32 %v74, %v76
  %v79 = vadd.s32 %v78, %v68
  %v80 = vadd.s32 %v79, %v70
  %v81 = vand.u32 %v58, 65535
  %v82 = vshrl.u32 %v58, 16
  %v83 = vand.u32 %v53, 65535
  %v84 = vshrl.u32 %v53, 16
  %v85 = vmul.u32 %v81, %v83
  %v86 = vmul.u32 %v81, %v84
  %v87 = vmul.u32 %v82, %v83
  %v88 = vmul.u32 %v82, %v84
  %v89 = vshll.u32 %v86, 16
  %v90 = vshrl.u32 %v86, 16
  %v91 = vshll.u32 %v87, 16
  %v92 = vshrl.u32 %v87, 16
  %vm93 = vc.u32 %v85, %v89
  %v94 = vsel %vm93, 1, 0
  %v95 = vadd.s32 %v85, %v89
  %v96 = vadd.s32 %v88, %v94
  %vm97 = vc.u32 %v95, %v91
  %v98 = vsel %vm97, 1, 0
  %v99 = vadd.s32 %v95, %v91
  %v100 = vadd.s32 %v96, %v98
  %v101 = vadd.s32 %v100, %v90
  %v102 = vadd.s32 %v101, %v92
  %v103 = vmul.u32 %v58, %v49
  %v104 = vadd.s32 %v80, %v99
  %vm105 = vc.u32 %v80, %v99
  %v106 = vadd.s32 %v102, 1
  %v107 = vsel %vm105, %v106, %v102
  %v108 = vadd.s32 %v103, %v107
  %v109 = vadd.s32 %v108, 536870912
  %v110 = vshrl.u32 %v109, 30
  %v111 = vshll.u32 %v110, 30
  %v112 = vsub.s32 %v108, %v111
  %vm113 = vcmp.lt.s32.totalorder %v112, 0
  %v114 = vsub.s32 0, %v112
  %v115 = vsel %vm113, %v114, %v112
  %v116 = vclz %v115
  %v117 = vsub.s32 %v116, 2
  %vm118 = vcmp.gt.s32.totalorder 0, %v117
  %v119 = vsel %vm118, 0, %v117
  %v120 = vsub.s32 32, %v119
  %v121 = vshll.u32 %v112, %v119
  %v122 = vshrl.u32 %v104, %v120
  %v123 = vor.u32 %v121, %v122
  %v124 = vsub.s32 4294967266, %v119
  %v125 = vadd.s32 %v124, 127
  %v126 = vshll.u32 %v125, 23
  %v127 = vor.u32 4788187, %v126
  %v128 = vand.u32 2147483647, %v127
  %v130 = vcvt.s32.f32 %v123
  %v131 = vmul.f32 %v130, %v128
  %v132 = vxor.u32 %v131, 2147483648
  %v133 = vsel %vm12, %v132, %v131
  %v134 = vsub.s32 4, %v110
  %v135 = vsel %vm12, %v134, %v110
  %v136 = vsel %vm11, %v8, %v133
  %v137 = vsel %vm11, 0, %v135
  %v138 = vmul.f32 %v136, %v136
  %v139 = vmul.f32 %v138, -0.001358992
  %v140 = vadd.f32 %v139, 0.041655596
  %v141 = vmul.f32 %v138, %v140
  %v142 = vadd.f32 %v141, -0.4999988
  %v143 = vmul.f32 %v138, %v142
  %v144 = vadd.f32 1.0, %v143
  %v145 = vmul.f32 %v136, %v136
  %v146 = vmul.f32 %v145, -0.00019511016
  %v147 = vadd.f32 %v146, 0.008332121
  %v148 = vmul.f32 %v145, %v147
  %v149 = vadd.f32 %v148, -0.16666654
  %v150 = vmul.f32 %v145, %v149
  %v151 = vadd.f32 %v150, 1.0
  %v152 = vmul.f32 %v151, %v136
  %vm153 = vweird.f32 %v8
  %v154 = vadd.s32 %v137, 3
  %v155 = vand.u32 %v154, 3
  %vm156 = vcmp.lt.s32.totalorder %v155, 2
  %vm157 = vcmp.eq.s32.totalorder %v155, 0
  %v158 = vxor.u32 %v152, 2147483648
  %v159 = vsel %vm157, %v144, %v158
  %vm160 = vcmp.eq.s32.totalorder %v155, 2
  %v161 = vxor.u32 %v144, 2147483648
  %v162 = vsel %vm160, %v161, %v152
  %v163 = vsel %vm156, %v159, %v162
  %v164 = vsel %vm153, nan, %v163
  %v165 = vand.u32 2147483647, %v9
  %vm166 = vcmp.le.f32.partialorder %v165, 0.7853982
  %vm167 = vcmp.lt.s32.totalorder %v9, 0
  %v168 = vand.u32 %v9, 2139095040
  %v169 = vshrl.u32 %v168, 23
  %v170 = vsub.s32 %v169, 127
  %v171 = vand.u32 2147483647, %v9
  %v172 = vand.u32 %v171, 8388607
  %v173 = vor.u32 %v172, 8388608
  %v174 = vsub.s32 0, %v173
  %v175 = vadd.s32 %v170, 1
  %vm176 = vcmp.gt.s32.totalorder %v175, 0
  %v177 = vsel %vm176, %v175, 0
  %v178 = vshrl.u32 %v177, 5
  %v179 = vand.u32 %v177, 31
  %v180 = vsub.s32 32, %v179
  %v181 = vshrl.u32 683565275, %v180
  %v182 = vshll.u32 683565275, %v179
  %v183 = vshrl.u32 2475754826, %v180
  %v184 = vor.u32 %v182, %v183
  %v185 = vshll.u32 2475754826, %v179
  %v186 = vshrl.u32 2131351028, %v180
  %v187 = vor.u32 %v185, %v186
  %v188 = vshll.u32 2131351028, %v179
  %v189 = vshrl.u32 2102212464, %v180
  %v190 = vor.u32 %v188, %v189
  %v191 = vshll.u32 2102212464, %v179
  %v192 = vshrl.u32 920167782, %v180
  %v193 = vor.u32 %v191, %v192
  %v194 = vshll.u32 920167782, %v179
  %v195 = vshrl.u32 1326507024, %v180
  %v196 = vor.u32 %v194, %v195
  %vm197 = vcmp.lt.s32.totalorder %v178, 1
  %vm198 = vcmp.lt.s32.totalorder %v178, 2
  %vm199 = vcmp.lt.s32.totalorder %v178, 3
  %vm200 = vcmp.lt.s32.totalorder %v178, 4
  %v201 = vsel %vm197, %v181, %v184
  %v202 = vsel %vm200, %v190, 2102212464
  %v203 = vsel %vm199, %v187, %v202
  %v204 = vsel %vm198, %v201, %v203
  %v205 = vsel %vm197, %v184, %v187
  %v206 = vsel %vm200, %v193, 920167782
  %v207 = vsel %vm199, %v190, %v206
  %v208 = vsel %vm198, %v205, %v207
  %v209 = vsel %vm197, %v187, %v190
  %v210 = vsel %vm200, %v196, 1326507024
  %v211 = vsel %vm199, %v193, %v210
  %v212 = vsel %vm198, %v209, %v211
  %v213 = vshll.u32 %v173, 8
  %v214 = vand.u32 %v213, 65535
  %v215 = vshrl.u32 %v213, 16
  %v216 = vand.u32 %v212, 65535
  %v217 = vshrl.u32 %v212, 16
  %v218 = vmul.u32 %v214, %v216
  %v219 = vmul.u32 %v214, %v217
  %v220 = vmul.u32 %v215, %v216
  %v221 = vmul.u32 %v215, %v217
  %v222 = vshll.u32 %v219, 16
  %v223 = vshrl.u32 %v219, 16
  %v224 = vshll.u32 %v220, 16
  %v225 = vshrl.u32 %v220, 16
  %vm226 = vc.u32 %v218, %v222
  %v227 = vsel %vm226, 1, 0
  %v228 = vadd.s32 %v218, %v222
  %v229 = vadd.s32 %v221, %v227
  %vm230 = vc.u32 %v228, %v224
  %v231 = vsel %vm230, 1, 0
  %v232 = vadd.s32 %v228, %v224
  %v233 = vadd.s32 %v229, %v231
  %v234 = vadd.s32 %v233, %v223
  %v235 = vadd.s32 %v234, %v225
  %v236 = vand.u32 %v213, 65535
  %v237 = vshrl.u32 %v213, 16
  %v238 = vand.u32 %v208, 65535
  %v239 = vshrl.u32 %v208, 16
  %v240 = vmul.u32 %v236, %v238
  %v241 = vmul.u32 %v236, %v239
  %v242 = vmul.u32 %v237, %v238
  %v243 = vmul.u32 %v237, %v239
  %v244 = vshll.u32 %v241, 16
  %v245 = vshrl.u32 %v241, 16
  %v246 = vshll.u32 %v242, 16
  %v247 = vshrl.u32 %v242, 16
  %vm248 = vc.u32 %v240, %v244
  %v249 = vsel %vm248, 1, 0
  %v250 = vadd.s32 %v240, %v244
  %v251 = vadd.s32 %v243, %v249
  %vm252 = vc.u32 %v250, %v246
  %v253 = vsel %vm252, 1, 0
  %v254 = vadd.s32 %v250, %v246
  %v255 = vadd.s32 %v251, %v253
  %v256 = vadd.s32 %v255, %v245
  %v257 = vadd.s32 %v256, %v247
  %v258 = vmul.u32 %v213, %v204
  %v259 = vadd.s32 %v235, %v254
  %vm260 = vc.u32 %v235, %v254
  %v261 = vadd.s32 %v257, 1
  %v262 = vsel %vm260, %v261, %v257
  %v263 = vadd.s32 %v258, %v262
  %v264 = vadd.s32 %v263, 536870912
  %v265 = vshrl.u32 %v264, 30
  %v266 = vshll.u32 %v265, 30
  %v267 = vsub.s32 %v263, %v266
  %vm268 = vcmp.lt.s32.totalorder %v267, 0
  %v269 = vsub.s32 0, %v267
  %v270 = vsel %vm268, %v269, %v267
  %v271 = vclz %v270
  %v272 = vsub.s32 %v271, 2
  %vm273 = vcmp.gt.s32.totalorder 0, %v272
  %v274 = vsel %vm273, 0, %v272
  %v275 = vsub.s32 32, %v274
  %v276 = vshll.u32 %v267, %v274
  %v277 = vshrl.u32 %v259, %v275
  %v278 = vor.u32 %v276, %v277
  %v279 = vsub.s32 4294967266, %v274
  %v280 = vadd.s32 %v279, 127
  %v281 = vshll.u32 %v280, 23
  %v282 = vor.u32 4788187, %v281
  %v283 = vand.u32 2147483647, %v282
  %v285 = vcvt.s32.f32 %v278
  %v286 = vmul.f32 %v285, %v283
  %v287 = vxor.u32 %v286, 2147483648
  %v288 = vsel %vm167, %v287, %v286
  %v289 = vsub.s32 4, %v265
  %v290 = vsel %vm167, %v289, %v265
  %v291 = vsel %vm166, %v9, %v288
  %v292 = vsel %vm166, 0, %v290
  %v293 = vmul.f32 %v291, %v291
  %v294 = vmul.f32 %v293, -0.001358992
  %v295 = vadd.f32 %v294, 0.041655596
  %v296 = vmul.f32 %v293, %v295
  %v297 = vadd.f32 %v296, -0.4999988
  %v298 = vmul.f32 %v293, %v297
  %v299 = vadd.f32 1.0, %v298
  %v300 = vmul.f32 %v291, %v291
  %v301 = vmul.f32 %v300, -0.00019511016
  %v302 = vadd.f32 %v301, 0.008332121
  %v303 = vmul.f32 %v300, %v302
  %v304 = vadd.f32 %v303, -0.16666654
  %v305 = vmul.f32 %v300, %v304
  %v306 = vadd.f32 %v305, 1.0
  %v307 = vmul.f32 %v306, %v291
  %vm308 = vweird.f32 %v9
  %v309 = vadd.s32 %v292, 3
  %v310 = vand.u32 %v309, 3
  %vm311 = vcmp.lt.s32.totalorder %v310, 2
  %vm312 = vcmp.eq.s32.totalorder %v310, 0
  %v313 = vxor.u32 %v307, 2147483648
  %v314 = vsel %vm312, %v299, %v313
  %vm315 = vcmp.eq.s32.totalorder %v310, 2
  %v316 = vxor.u32 %v299, 2147483648
  %v317 = vsel %vm315, %v316, %v307
  %v318 = vsel %vm311, %v314, %v317
  %v319 = vsel %vm308, nan, %v318
  %320 = vst [vmem:[%s1] sm:$0xff] %v164
  %321 = vst [vmem:[%s1 + $0x8] sm:$0xff] %v319
  // Predicated region
  $region6: #{sin_pallas.1} parent=0 // pred_check
    _
  $region7: #{sin_pallas.1} parent=0 // pred_check_branch
    %323 = sbr.rel (0) target = $region9
  $region8: #{sin_pallas.1} parent=0 // pred_region
    _
  $region9: #{sin_pallas.1} parent=0 // pred_fallthru
    _
  // Predicated region
  $region10: #{sin_pallas.1} parent=0 // pred_check
    _
  $region11: #{sin_pallas.1} parent=0 // pred_check_branch
    %325 = sbr.rel (0) target = $region13
  $region12: #{sin_pallas.1} parent=0 // pred_region
    _
  $region13: #{sin_pallas.1} parent=0 // pred_fallthru
    _

</llo_original>
